<compile_context>
chip_gen: v7x
topology: tpu7x:2x2x1
jax: 0.10.0
libtpu: 0.0.40
codegen_flags: <defaults>
</compile_context>

<pallas_src>
import functools

import jax
import jax.numpy as jnp
from jax.experimental import pallas as pl
from jax.experimental.pallas import tpu as pltpu


def _patch_unembed_kernel(x_ref, o_ref, *, k, P):
    # x_ref: (1, k, P, W*P, D)  per (patch-row chunk): sublanes = (w*P + p2)
    #                           pixel index, lanes = channel d (dense, no pad).
    # o_ref: (1, D, k*P, W*P)   NCHW output rows for this (batch, row chunk).
    for hh in range(k):              # k*P small static iterations per grid step
        for p1 in range(P):
            tile = x_ref[0, hh, p1, :, :]          # (W*P, D)
            # Channel relocation lane -> sublane (one small XLU 2-D transpose),
            # then a single lane-dense store spanning the full output width.
            o_ref[0, :, hh * P + p1, :] = tile.T   # (D, W*P)


def _pick_row_chunk(H, P):
    """Smallest k dividing H with k*P a multiple of 8 (sublane tile rule)."""
    for k in range(1, H + 1):
        if H % k == 0 and (k * P) % 8 == 0:
            return k
    return H  # full row extent is always a legal block size


def patch_unembedding(x, *, image_size, patch_size):
    """x: [B, 1 + (image_size//patch_size)**2, patch_size**2 * D] -> NCHW."""
    assert image_size % patch_size == 0, "image_size must be divisible by patch_size"
    B, S, F = x.shape
    Hn = Wn = image_size // patch_size
    P = patch_size
    assert S == Hn * Wn + 1, "expected CLS token + H*W patch tokens"
    assert F % (P * P) == 0
    D = F // (P * P)
    WP = Wn * P

    # Glue: drop CLS and swap the (w, p1) token-order dims so that, per
    # (h, p1), the (w, p2) pixels are contiguous along the kernel's sublane
    # axis.  XLA fuses slice + permute into one copy (same HBM cost as the
    # CLS drop alone); no padding, and the channel de-interleave stays in the
    # kernel.  The reshapes are free row-major regroupings.
    xb = (x[:, 1:, :]
          .reshape(B, Hn, Wn, P, P, D)
          .transpose(0, 1, 3, 2, 4, 5)          # (B, H, P1, W, P2, D)
          .reshape(B, Hn, P, WP, D))

    k = _pick_row_chunk(Hn, P)                  # rows per grid step
    kernel = functools.partial(_patch_unembed_kernel, k=k, P=P)
    out = pl.pallas_call(
        kernel,
        out_shape=jax.ShapeDtypeStruct((B, D, Hn * P, WP), x.dtype),
        grid_spec=pltpu.PrefetchScalarGridSpec(
            num_scalar_prefetch=0,
            grid=(B, Hn // k),
            in_specs=[pl.BlockSpec((1, k, P, WP, D),
                                   lambda b, r: (b, r, 0, 0, 0))],
            out_specs=pl.BlockSpec((1, D, k * P, WP),
                                   lambda b, r: (b, 0, r, 0)),
        ),
        # Both axes write disjoint output blocks -> parallel (v7x megacore).
        compiler_params=pltpu.CompilerParams(
            dimension_semantics=("parallel", "parallel")),
    )(xb)
    return out


if __name__ == "__main__":
    # Small shapes consistent with the module: image 16x16, patch 4 -> 4x4=16
    # patch tokens (+1 CLS), per-token features = 4*4*8 = 128 (D=8 channels).
    image_size, patch_size, D, B = 16, 4, 8, 2
    Hn = Wn = image_size // patch_size
    P = patch_size
    S = Hn * Wn + 1
    F = P * P * D

    key = jax.random.PRNGKey(0)
    x = jax.random.normal(key, (B, S, F), dtype=jnp.float32)

    out = patch_unembedding(x, image_size=image_size, patch_size=patch_size)
    out = jax.block_until_ready(out)

    # Pure-JAX reference of the PyTorch forward (drop CLS + einops rearrange).
    ref = (x[:, 1:, :]
           .reshape(B, Hn, Wn, P, P, D)
           .transpose(0, 5, 1, 3, 2, 4)
           .reshape(B, D, Hn * P, Wn * P))

    assert out.shape == (B, D, Hn * P, Wn * P)
    assert out.dtype == ref.dtype
    assert bool(jnp.array_equal(out, ref)), "kernel output mismatch"
    print("KERNEL_OK")
</pallas_src>

<mosaic_0001>
module attributes {stable_mosaic.version = 11 : i64} {
  func.func @_patch_unembed_kernel(%arg0: i32, %arg1: i32, %arg2: memref<1x2x4x16x8xf32, #tpu.memory_space<vmem>>, %arg3: memref<1x8x8x16xf32, #tpu.memory_space<vmem>>) attributes {dimension_semantics = [#tpu.dimension_semantics<parallel>, #tpu.dimension_semantics<parallel>], iteration_bounds = array<i64: 2, 2>, scalar_prefetch = 0 : i64, scratch_operands = 0 : i64, tpu.core_type = #tpu.core_type<tc>, window_params = [{transform_indices = @transform_0, window_bounds = array<i64: 1, 2, 4, 16, 8>}, {transform_indices = @transform_1, window_bounds = array<i64: 1, 8, 8, 16>}]} {
    %c0 = arith.constant 0 : index
    %c0_0 = arith.constant 0 : index
    %c0_1 = arith.constant 0 : index
    %c0_2 = arith.constant 0 : index
    %c0_3 = arith.constant 0 : index
    %0 = vector.load %arg2[%c0, %c0_0, %c0_1, %c0_2, %c0_3] : memref<1x2x4x16x8xf32, #tpu.memory_space<vmem>>, vector<1x1x1x16x8xf32>
    %1 = vector.shape_cast %0 : vector<1x1x1x16x8xf32> to vector<16x8xf32>
    %2 = tpu.transpose %1, [1, 0] : vector<16x8xf32> -> vector<8x16xf32>
    %c0_4 = arith.constant 0 : index
    %c0_5 = arith.constant 0 : index
    %c0_6 = arith.constant 0 : index
    %c0_7 = arith.constant 0 : index
    %3 = vector.load %arg3[%c0_4, %c0_5, %c0_6, %c0_7] : memref<1x8x8x16xf32, #tpu.memory_space<vmem>>, vector<1x8x1x16xf32>
    %4 = vector.shape_cast %3 : vector<1x8x1x16xf32> to vector<8x16xf32>
    %5 = vector.shape_cast %2 : vector<8x16xf32> to vector<1x8x1x16xf32>
    tpu.vector_store %arg3[%c0_4, %c0_5, %c0_6, %c0_7], %5 {strides = array<i32>} : memref<1x8x8x16xf32, #tpu.memory_space<vmem>>, vector<1x8x1x16xf32>,
    %c0_8 = arith.constant 0 : index
    %c0_9 = arith.constant 0 : index
    %c1 = arith.constant 1 : index
    %c0_10 = arith.constant 0 : index
    %c0_11 = arith.constant 0 : index
    %6 = vector.load %arg2[%c0_8, %c0_9, %c1, %c0_10, %c0_11] : memref<1x2x4x16x8xf32, #tpu.memory_space<vmem>>, vector<1x1x1x16x8xf32>
    %7 = vector.shape_cast %6 : vector<1x1x1x16x8xf32> to vector<16x8xf32>
    %8 = tpu.transpose %7, [1, 0] : vector<16x8xf32> -> vector<8x16xf32>
    %c0_12 = arith.constant 0 : index
    %c0_13 = arith.constant 0 : index
    %c1_14 = arith.constant 1 : index
    %c0_15 = arith.constant 0 : index
    %9 = vector.load %arg3[%c0_12, %c0_13, %c1_14, %c0_15] : memref<1x8x8x16xf32, #tpu.memory_space<vmem>>, vector<1x8x1x16xf32>
    %10 = vector.shape_cast %9 : vector<1x8x1x16xf32> to vector<8x16xf32>
    %11 = vector.shape_cast %8 : vector<8x16xf32> to vector<1x8x1x16xf32>
    tpu.vector_store %arg3[%c0_12, %c0_13, %c1_14, %c0_15], %11 {strides = array<i32>} : memref<1x8x8x16xf32, #tpu.memory_space<vmem>>, vector<1x8x1x16xf32>,
    %c0_16 = arith.constant 0 : index
    %c0_17 = arith.constant 0 : index
    %c2 = arith.constant 2 : index
    %c0_18 = arith.constant 0 : index
    %c0_19 = arith.constant 0 : index
    %12 = vector.load %arg2[%c0_16, %c0_17, %c2, %c0_18, %c0_19] : memref<1x2x4x16x8xf32, #tpu.memory_space<vmem>>, vector<1x1x1x16x8xf32>
    %13 = vector.shape_cast %12 : vector<1x1x1x16x8xf32> to vector<16x8xf32>
    %14 = tpu.transpose %13, [1, 0] : vector<16x8xf32> -> vector<8x16xf32>
    %c0_20 = arith.constant 0 : index
    %c0_21 = arith.constant 0 : index
    %c2_22 = arith.constant 2 : index
    %c0_23 = arith.constant 0 : index
    %15 = vector.load %arg3[%c0_20, %c0_21, %c2_22, %c0_23] : memref<1x8x8x16xf32, #tpu.memory_space<vmem>>, vector<1x8x1x16xf32>
    %16 = vector.shape_cast %15 : vector<1x8x1x16xf32> to vector<8x16xf32>
    %17 = vector.shape_cast %14 : vector<8x16xf32> to vector<1x8x1x16xf32>
    tpu.vector_store %arg3[%c0_20, %c0_21, %c2_22, %c0_23], %17 {strides = array<i32>} : memref<1x8x8x16xf32, #tpu.memory_space<vmem>>, vector<1x8x1x16xf32>,
    %c0_24 = arith.constant 0 : index
    %c0_25 = arith.constant 0 : index
    %c3 = arith.constant 3 : index
    %c0_26 = arith.constant 0 : index
    %c0_27 = arith.constant 0 : index
    %18 = vector.load %arg2[%c0_24, %c0_25, %c3, %c0_26, %c0_27] : memref<1x2x4x16x8xf32, #tpu.memory_space<vmem>>, vector<1x1x1x16x8xf32>
    %19 = vector.shape_cast %18 : vector<1x1x1x16x8xf32> to vector<16x8xf32>
    %20 = tpu.transpose %19, [1, 0] : vector<16x8xf32> -> vector<8x16xf32>
    %c0_28 = arith.constant 0 : index
    %c0_29 = arith.constant 0 : index
    %c3_30 = arith.constant 3 : index
    %c0_31 = arith.constant 0 : index
    %21 = vector.load %arg3[%c0_28, %c0_29, %c3_30, %c0_31] : memref<1x8x8x16xf32, #tpu.memory_space<vmem>>, vector<1x8x1x16xf32>
    %22 = vector.shape_cast %21 : vector<1x8x1x16xf32> to vector<8x16xf32>
    %23 = vector.shape_cast %20 : vector<8x16xf32> to vector<1x8x1x16xf32>
    tpu.vector_store %arg3[%c0_28, %c0_29, %c3_30, %c0_31], %23 {strides = array<i32>} : memref<1x8x8x16xf32, #tpu.memory_space<vmem>>, vector<1x8x1x16xf32>,
    %c0_32 = arith.constant 0 : index
    %c1_33 = arith.constant 1 : index
    %c0_34 = arith.constant 0 : index
    %c0_35 = arith.constant 0 : index
    %c0_36 = arith.constant 0 : index
    %24 = vector.load %arg2[%c0_32, %c1_33, %c0_34, %c0_35, %c0_36] : memref<1x2x4x16x8xf32, #tpu.memory_space<vmem>>, vector<1x1x1x16x8xf32>
    %25 = vector.shape_cast %24 : vector<1x1x1x16x8xf32> to vector<16x8xf32>
    %26 = tpu.transpose %25, [1, 0] : vector<16x8xf32> -> vector<8x16xf32>
    %c0_37 = arith.constant 0 : index
    %c0_38 = arith.constant 0 : index
    %c4 = arith.constant 4 : index
    %c0_39 = arith.constant 0 : index
    %27 = vector.load %arg3[%c0_37, %c0_38, %c4, %c0_39] : memref<1x8x8x16xf32, #tpu.memory_space<vmem>>, vector<1x8x1x16xf32>
    %28 = vector.shape_cast %27 : vector<1x8x1x16xf32> to vector<8x16xf32>
    %29 = vector.shape_cast %26 : vector<8x16xf32> to vector<1x8x1x16xf32>
    tpu.vector_store %arg3[%c0_37, %c0_38, %c4, %c0_39], %29 {strides = array<i32>} : memref<1x8x8x16xf32, #tpu.memory_space<vmem>>, vector<1x8x1x16xf32>,
    %c0_40 = arith.constant 0 : index
    %c1_41 = arith.constant 1 : index
    %c1_42 = arith.constant 1 : index
    %c0_43 = arith.constant 0 : index
    %c0_44 = arith.constant 0 : index
    %30 = vector.load %arg2[%c0_40, %c1_41, %c1_42, %c0_43, %c0_44] : memref<1x2x4x16x8xf32, #tpu.memory_space<vmem>>, vector<1x1x1x16x8xf32>
    %31 = vector.shape_cast %30 : vector<1x1x1x16x8xf32> to vector<16x8xf32>
    %32 = tpu.transpose %31, [1, 0] : vector<16x8xf32> -> vector<8x16xf32>
    %c0_45 = arith.constant 0 : index
    %c0_46 = arith.constant 0 : index
    %c5 = arith.constant 5 : index
    %c0_47 = arith.constant 0 : index
    %33 = vector.load %arg3[%c0_45, %c0_46, %c5, %c0_47] : memref<1x8x8x16xf32, #tpu.memory_space<vmem>>, vector<1x8x1x16xf32>
    %34 = vector.shape_cast %33 : vector<1x8x1x16xf32> to vector<8x16xf32>
    %35 = vector.shape_cast %32 : vector<8x16xf32> to vector<1x8x1x16xf32>
    tpu.vector_store %arg3[%c0_45, %c0_46, %c5, %c0_47], %35 {strides = array<i32>} : memref<1x8x8x16xf32, #tpu.memory_space<vmem>>, vector<1x8x1x16xf32>,
    %c0_48 = arith.constant 0 : index
    %c1_49 = arith.constant 1 : index
    %c2_50 = arith.constant 2 : index
    %c0_51 = arith.constant 0 : index
    %c0_52 = arith.constant 0 : index
    %36 = vector.load %arg2[%c0_48, %c1_49, %c2_50, %c0_51, %c0_52] : memref<1x2x4x16x8xf32, #tpu.memory_space<vmem>>, vector<1x1x1x16x8xf32>
    %37 = vector.shape_cast %36 : vector<1x1x1x16x8xf32> to vector<16x8xf32>
    %38 = tpu.transpose %37, [1, 0] : vector<16x8xf32> -> vector<8x16xf32>
    %c0_53 = arith.constant 0 : index
    %c0_54 = arith.constant 0 : index
    %c6 = arith.constant 6 : index
    %c0_55 = arith.constant 0 : index
    %39 = vector.load %arg3[%c0_53, %c0_54, %c6, %c0_55] : memref<1x8x8x16xf32, #tpu.memory_space<vmem>>, vector<1x8x1x16xf32>
    %40 = vector.shape_cast %39 : vector<1x8x1x16xf32> to vector<8x16xf32>
    %41 = vector.shape_cast %38 : vector<8x16xf32> to vector<1x8x1x16xf32>
    tpu.vector_store %arg3[%c0_53, %c0_54, %c6, %c0_55], %41 {strides = array<i32>} : memref<1x8x8x16xf32, #tpu.memory_space<vmem>>, vector<1x8x1x16xf32>,
    %c0_56 = arith.constant 0 : index
    %c1_57 = arith.constant 1 : index
    %c3_58 = arith.constant 3 : index
    %c0_59 = arith.constant 0 : index
    %c0_60 = arith.constant 0 : index
    %42 = vector.load %arg2[%c0_56, %c1_57, %c3_58, %c0_59, %c0_60] : memref<1x2x4x16x8xf32, #tpu.memory_space<vmem>>, vector<1x1x1x16x8xf32>
    %43 = vector.shape_cast %42 : vector<1x1x1x16x8xf32> to vector<16x8xf32>
    %44 = tpu.transpose %43, [1, 0] : vector<16x8xf32> -> vector<8x16xf32>
    %c0_61 = arith.constant 0 : index
    %c0_62 = arith.constant 0 : index
    %c7 = arith.constant 7 : index
    %c0_63 = arith.constant 0 : index
    %45 = vector.load %arg3[%c0_61, %c0_62, %c7, %c0_63] : memref<1x8x8x16xf32, #tpu.memory_space<vmem>>, vector<1x8x1x16xf32>
    %46 = vector.shape_cast %45 : vector<1x8x1x16xf32> to vector<8x16xf32>
    %47 = vector.shape_cast %44 : vector<8x16xf32> to vector<1x8x1x16xf32>
    tpu.vector_store %arg3[%c0_61, %c0_62, %c7, %c0_63], %47 {strides = array<i32>} : memref<1x8x8x16xf32, #tpu.memory_space<vmem>>, vector<1x8x1x16xf32>,
    return
  }
  func.func @transform_0(%arg0: i32, %arg1: i32) -> (i32, i32, i32, i32, i32) {
    %c0_i32 = arith.constant 0 : i32
    %c0_i32_0 = arith.constant 0 : i32
    %c0_i32_1 = arith.constant 0 : i32
    %c0_i32_2 = arith.constant 0 : i32
    return %arg0, %arg1, %c0_i32, %c0_i32_0, %c0_i32_1 : i32, i32, i32, i32, i32
  }
  func.func @transform_1(%arg0: i32, %arg1: i32) -> (i32, i32, i32, i32) {
    %c0_i32 = arith.constant 0 : i32
    %c0_i32_0 = arith.constant 0 : i32
    %c0_i32_1 = arith.constant 0 : i32
    return %arg0, %c0_i32, %arg1, %c0_i32_0 : i32, i32, i32, i32
  }
}

</mosaic_0001>

<llo_original>
// kernel: tpu_custom_call.1
$region0: #{tpu_custom_call.1}
  #allocation0 [shape = 'u32[]', space=smem, size = 0x4, offset = 0x4, fixed_abs, tag = 'smem constant byte address 0x4 - core index']
  #allocation1 [shape = 'u32[144,128]{1,0:T(1,128)}', space=vmem, size = 0x12000, scoped, tag = 'internal scratch']
  %s0 = inlined_call_operand.vmem [shape: f32[2,4,4,16,8], index: 0, kind: input, shape index: {}]
  %s1 = inlined_call_operand.hbm [shape: f32[2,8,16,16], index: 1, kind: output, shape index: {}]
  %s2 = sld [smem:[#allocation0]]
  $region37: #{tpu_custom_call.1} parent=0
    _
  %s4 = ssub.s32 1, %s2
  %s5 = scalar_select 0, %s4, %s2
  $region1: #{tpu_custom_call.1} parent=0
    #allocation2 [shape = 'u8[65536]{0}', space=vmem, size = 0x10000, scoped, tag = 'output window, operand 0']
    #allocation3 [shape = 's32[2]{0}', space=sflag, size = 0x8, scoped, tag = 'scoped memory for tpu_custom_call.1']
    %6 = vsyncpa [#allocation3], 0
    %s7 = scalar_lea.sflag [#allocation3], 1
    %8 = vsyncpa %s7, 0
    loop: start=0, step=1, limit=6
    $region2: #{tpu_custom_call.1} parent=1 // loop_pre_header
      _
    $region3: #{tpu_custom_call.1} parent=1 // loop_header
      %s10 = sphi 0, %s14
      %p11 = scmp.ge.s32.totalorder %s10, 6
      %s17 = sphi 0, %s29
      %s18 = sphi 0, %s25
      %s19 = sphi 0, %s17
      %s20 = sphi 0, %s18
      %s21 = sphi 0, %s19
      %s22 = sphi 0, %s20
      %s34 = sphi 0, %s36
      %s37 = sphi 0, %s34
      %s38 = sphi 0, %s37
      %s54 = sphi 0, %s38
      %s62 = sphi 0, %s64
      %s65 = sphi 0, %s62
      %s66 = sphi 0, %s65
      %s82 = sphi 0, %s66
    $region4: #{tpu_custom_call.1} parent=1 // loop_header_branch
      %13 = sbr.rel (%p11) target = $region8
    $region5: #{tpu_custom_call.1} parent=1 // loop_body
      %s15 = ssub.s32 %s10, 1
      %s16 = ssub.s32 %s10, 2
      %s23 = sadd.s32 1, %s18
      %p24 = scmp.ge.s32.totalorder %s23, 2
      %s25 = scalar_select %p24, 0, %s23
      %s26 = sadd.s32 1, %s17
      %s27 = scalar_select %p24, %s26, %s17
      %p28 = scmp.ge.s32.totalorder %s27, 2
      %s29 = scalar_select %p28, 0, %s27
      %s30 = ssub.s32 %s17, %s29
      %s31 = ssub.s32 %s18, %s25
      %s32 = sor.u32 %s30, %s31
      %p33 = scmp.eq.s32.totalorder %s32, 0
      %s35 = sadd.s32 %s34, 1
      %s36 = scalar_select %p33, %s34, %s35
      %p39 = pneg %p33
      %p40 = scmp.eq.s32.totalorder %s10, 3
      %p41 = por %p39, %p40
      %p42 = scmp.ne.s32.totalorder %s34, %s37
      %p43 = scmp.eq.s32.totalorder %s10, 0
      %p44 = por %p42, %p43
      %p45 = scmp.ne.s32.totalorder %s34, %s37
      %p46 = scmp.eq.s32.totalorder %s15, 3
      %p47 = por %p45, %p46
      %p48 = scmp.ne.s32.totalorder %s37, %s38
      %p49 = scmp.eq.s32.totalorder %s15, 0
      %p50 = por %p48, %p49
      %p51 = scmp.ne.s32.totalorder %s37, %s38
      %p52 = scmp.eq.s32.totalorder %s16, 3
      %p53 = por %p51, %p52
      %p55 = scmp.ne.s32.totalorder %s38, %s54
      %p56 = scmp.eq.s32.totalorder %s16, 0
      %p57 = por %p55, %p56
      %s58 = ssub.s32 %s17, %s29
      %s59 = ssub.s32 %s18, %s25
      %s60 = sor.u32 %s58, %s59
      %p61 = scmp.eq.s32.totalorder %s60, 0
      %s63 = sadd.s32 %s62, 1
      %s64 = scalar_select %p61, %s62, %s63
      %p67 = pneg %p61
      %p68 = scmp.eq.s32.totalorder %s10, 3
      %p69 = por %p67, %p68
      %p70 = scmp.ne.s32.totalorder %s62, %s65
      %p71 = scmp.eq.s32.totalorder %s10, 0
      %p72 = por %p70, %p71
      %p73 = scmp.ne.s32.totalorder %s62, %s65
      %p74 = scmp.eq.s32.totalorder %s15, 3
      %p75 = por %p73, %p74
      %p76 = scmp.ne.s32.totalorder %s65, %s66
      %p77 = scmp.eq.s32.totalorder %s15, 0
      %p78 = por %p76, %p77
      %p79 = scmp.ne.s32.totalorder %s65, %s66
      %p80 = scmp.eq.s32.totalorder %s16, 3
      %p81 = por %p79, %p80
      %p83 = scmp.ne.s32.totalorder %s66, %s82
      %p84 = scmp.eq.s32.totalorder %s16, 0
      %p85 = por %p83, %p84
      %p86 = scmp.le.s32.totalorder 1, %s10
      %p87 = scmp.lt.s32.totalorder %s10, 5
      %p88 = pnand %p86, %p87
      %p89 = pneg %p88
      // Predicated region
      $region9: #{tpu_custom_call.1} parent=5 // pred_check
        _
      $region10: #{tpu_custom_call.1} parent=5 // pred_check_branch
        %91 = sbr.rel (%p88) target = $region12
      $region11: #{tpu_custom_call.1} parent=5 // pred_region
        %s92 = ssub.s32 %s10, 1
      $region12: #{tpu_custom_call.1} parent=5 // pred_fallthru
        _
      %p93 = scmp.lt.s32.totalorder %s10, 4
      // Predicated region
      $region13: #{tpu_custom_call.1} parent=5 // pred_check
        %p94 = pneg %p93
      $region14: #{tpu_custom_call.1} parent=5 // pred_check_branch
        %96 = sbr.rel (%p94) target = $region16
      $region15: #{tpu_custom_call.1} parent=5 // pred_region
        // Predicated region
        $region17: #{tpu_custom_call.1} parent=15 // pred_check
          %p97 = pneg %p44
        $region18: #{tpu_custom_call.1} parent=15 // pred_check_branch
          %99 = sbr.rel (%p97) target = $region20
        $region19: #{tpu_custom_call.1} parent=15 // pred_region
          %s100 = smul.u32 2, %s18
          %p101 = scmp.lt.s32.totalorder %s17, 1
          %s102 = scalar_select %p101, %s17, 1
          %p103 = scmp.lt.s32.totalorder %s100, 3
          %s104 = scalar_select %p103, %s100, 3
          %s105 = smul.addr %s104, 8
          %s106 = smul.addr %s102, 32
          %s107 = sadd.s32 %s105, %s106
          %s108 = smul.addr %s107, 8
          %s109 = scalar_lea.vmem %s0, %s108
          %s110 = smul.u32 2, %s18
        $region20: #{tpu_custom_call.1} parent=15 // pred_fallthru
          _
      $region16: #{tpu_custom_call.1} parent=5 // pred_fallthru
        _
      %p111 = scmp.le.s32.totalorder 1, %s10
      %p112 = scmp.lt.s32.totalorder %s10, 5
      %p113 = pnand %p111, %p112
      %p114 = pneg %p113
      // Predicated region
      $region21: #{tpu_custom_call.1} parent=5 // pred_check
        _
      $region22: #{tpu_custom_call.1} parent=5 // pred_check_branch
        %116 = sbr.rel (%p113) target = $region24
      $region23: #{tpu_custom_call.1} parent=5 // pred_region
        %s117 = ssub.s32 %s10, 1
        %s118 = smul.u32 2, %s20
        %p119 = scmp.lt.s32.totalorder %s19, 1
        %s120 = scalar_select %p119, %s19, 1
        %p121 = scmp.lt.s32.totalorder %s118, 3
        %s122 = scalar_select %p121, %s118, 3
        %s123 = smul.addr %s122, 8
        %s124 = smul.addr %s120, 32
        %s125 = sadd.s32 %s123, %s124
        %s126 = smul.addr %s125, 8
        %s127 = scalar_lea.vmem %s0, %s126
        %p128 = pneg %p50
        %p129 = pneg %p47
        %p130 = pneg %p78
        %p131 = pneg %p75
        %s132 = sand.u32 %s65, 1
        %s133 = scalar_lea.sflag [#allocation3], %s132
        %s134 = sand.u32 %s65, 1
        %s135 = smul.addr %s134, 64
        %s136 = scalar_lea.vmem [#allocation2], %s135
        %s137 = smul.u32 2, %s20
        %p138 = scmp.lt.s32.totalorder %s19, 1
        %s139 = scalar_select %p138, %s19, 1
        %p140 = scmp.lt.s32.totalorder %s137, 3
        %s141 = scalar_select %p140, %s137, 3
        %s142 = smul.addr %s141, 8
        %s143 = smul.addr %s139, 32
        %s144 = sadd.s32 %s142, %s143
        %s145 = smul.addr %s144, 8
        %s146 = scalar_lea.vmem %s0, %s145
        %s147 = smul.u32 2, %s20
        %v148 = vld [vmem:[%s146] sm:$0xff]
        %v149 = vld [vmem:[%s146 + $0x8] sm:$0xff]
        %150 = vxpose.xlu0.b32.start [1/16] %v148, 128
        %151 = vxpose.xlu0.b32.cont [2/16] %v149, 128
        %152 = vxpose.xlu0.b32.cont [3/16] 0.0, 128
        %153 = vxpose.xlu0.b32.cont [4/16] 0.0, 128
        %154 = vxpose.xlu0.b32.cont [5/16] 0.0, 128
        %155 = vxpose.xlu0.b32.cont [6/16] 0.0, 128
        %156 = vxpose.xlu0.b32.cont [7/16] 0.0, 128
        %157 = vxpose.xlu0.b32.cont [8/16] 0.0, 128
        %158 = vxpose.xlu0.b32.cont [9/16] 0.0, 128
        %159 = vxpose.xlu0.b32.cont [10/16] 0.0, 128
        %160 = vxpose.xlu0.b32.cont [11/16] 0.0, 128
        %161 = vxpose.xlu0.b32.cont [12/16] 0.0, 128
        %162 = vxpose.xlu0.b32.cont [13/16] 0.0, 128
        %163 = vxpose.xlu0.b32.cont [14/16] 0.0, 128
        %164 = vxpose.xlu0.b32.cont [15/16] 0.0, 128
        %165 = vxpose.xlu0.b32.end [16/16] 0.0, 128
        %v166 = vpop.trf.xlu0
        %v167 = vpop.trf.xlu0
        %v168 = vpop.trf.xlu0
        %v169 = vpop.trf.xlu0
        %v170 = vpop.trf.xlu0
        %v171 = vpop.trf.xlu0
        %v172 = vpop.trf.xlu0
        %v173 = vpop.trf.xlu0
        %v174 = vpop.trf.xlu0
        %v175 = vpop.trf.xlu0
        %v176 = vpop.trf.xlu0
        %v177 = vpop.trf.xlu0
        %v178 = vpop.trf.xlu0
        %v179 = vpop.trf.xlu0
        %v180 = vpop.trf.xlu0
        %v181 = vpop.trf.xlu0
        %v183 = vcombine.high %v166, %v166
        %v185 = vunpack.c.l.s4 1966171168
        %v186 = vunpack.c.0.s8 %v185
        %v187 = vlaneseq
        %v188 = vshrl.u32 %v187, 7
        %v189 = vsub.s32 %v186, %v188
        %v190 = vrot.slane %v166, %v189
        %v192 = vunpack.c.l.s4 1966171168
        %v193 = vunpack.c.0.s8 %v192
        %v194 = vlaneseq
        %v195 = vshrl.u32 %v194, 7
        %v196 = vsub.s32 %v193, %v195
        %v197 = vrot.slane %v183, %v196
        %v198 = vcombine.high %v190, %v190
        %v199 = vcombine.high %v197, %v197
        %v201 = vunpack.c.l.s4 1966171168
        %v202 = vunpack.c.0.s8 %v201
        %v203 = vlaneseq
        %v204 = vshrl.u32 %v203, 7
        %v205 = vsub.s32 %v202, %v204
        %v206 = vrot.slane %v190, %v205
        %v208 = vunpack.c.l.s4 1966171168
        %v209 = vunpack.c.0.s8 %v208
        %v210 = vlaneseq
        %v211 = vshrl.u32 %v210, 7
        %v212 = vsub.s32 %v209, %v211
        %v213 = vrot.slane %v197, %v212
        %v215 = vunpack.c.l.s4 1966171168
        %v216 = vunpack.c.0.s8 %v215
        %v217 = vlaneseq
        %v218 = vshrl.u32 %v217, 7
        %v219 = vsub.s32 %v216, %v218
        %v220 = vrot.slane %v198, %v219
        %v222 = vunpack.c.l.s4 1966171168
        %v223 = vunpack.c.0.s8 %v222
        %v224 = vlaneseq
        %v225 = vshrl.u32 %v224, 7
        %v226 = vsub.s32 %v223, %v225
        %v227 = vrot.slane %v199, %v226
        %v228 = vcombine.high %v206, %v206
        %v229 = vcombine.high %v213, %v213
        %v230 = vcombine.high %v220, %v220
        %v231 = vcombine.high %v227, %v227
        %vm240 = vcmask 122880
        %241 = vst.msk [vmem:[%s136] sm:$0x1] %vm240, %v206
        %242 = vst.msk [vmem:[%s136 + $0x8] sm:$0x1] %vm240, %v220
        %243 = vst.msk [vmem:[%s136 + $0x10] sm:$0x1] %vm240, %v228
        %244 = vst.msk [vmem:[%s136 + $0x18] sm:$0x1] %vm240, %v230
        %245 = vst.msk [vmem:[%s136 + $0x20] sm:$0x1] %vm240, %v213
        %246 = vst.msk [vmem:[%s136 + $0x28] sm:$0x1] %vm240, %v227
        %247 = vst.msk [vmem:[%s136 + $0x30] sm:$0x1] %vm240, %v229
        %248 = vst.msk [vmem:[%s136 + $0x38] sm:$0x1] %vm240, %v231
        %s249 = scalar_lea.vmem %s146, 16
        %v250 = vld [vmem:[%s249] sm:$0xff]
        %v251 = vld [vmem:[%s249 + $0x8] sm:$0xff]
        %252 = vxpose.xlu0.b32.start [1/16] %v250, 128
        %253 = vxpose.xlu0.b32.cont [2/16] %v251, 128
        %254 = vxpose.xlu0.b32.cont [3/16] 0.0, 128
        %255 = vxpose.xlu0.b32.cont [4/16] 0.0, 128
        %256 = vxpose.xlu0.b32.cont [5/16] 0.0, 128
        %257 = vxpose.xlu0.b32.cont [6/16] 0.0, 128
        %258 = vxpose.xlu0.b32.cont [7/16] 0.0, 128
        %259 = vxpose.xlu0.b32.cont [8/16] 0.0, 128
        %260 = vxpose.xlu0.b32.cont [9/16] 0.0, 128
        %261 = vxpose.xlu0.b32.cont [10/16] 0.0, 128
        %262 = vxpose.xlu0.b32.cont [11/16] 0.0, 128
        %263 = vxpose.xlu0.b32.cont [12/16] 0.0, 128
        %264 = vxpose.xlu0.b32.cont [13/16] 0.0, 128
        %265 = vxpose.xlu0.b32.cont [14/16] 0.0, 128
        %266 = vxpose.xlu0.b32.cont [15/16] 0.0, 128
        %267 = vxpose.xlu0.b32.end [16/16] 0.0, 128
        %v268 = vpop.trf.xlu0
        %v269 = vpop.trf.xlu0
        %v270 = vpop.trf.xlu0
        %v271 = vpop.trf.xlu0
        %v272 = vpop.trf.xlu0
        %v273 = vpop.trf.xlu0
        %v274 = vpop.trf.xlu0
        %v275 = vpop.trf.xlu0
        %v276 = vpop.trf.xlu0
        %v277 = vpop.trf.xlu0
        %v278 = vpop.trf.xlu0
        %v279 = vpop.trf.xlu0
        %v280 = vpop.trf.xlu0
        %v281 = vpop.trf.xlu0
        %v282 = vpop.trf.xlu0
        %v283 = vpop.trf.xlu0
        %v285 = vcombine.high %v268, %v268
        %v287 = vunpack.c.l.s4 1966171168
        %v288 = vunpack.c.0.s8 %v287
        %v289 = vlaneseq
        %v290 = vshrl.u32 %v289, 7
        %v291 = vsub.s32 %v288, %v290
        %v292 = vrot.slane %v268, %v291
        %v294 = vunpack.c.l.s4 1966171168
        %v295 = vunpack.c.0.s8 %v294
        %v296 = vlaneseq
        %v297 = vshrl.u32 %v296, 7
        %v298 = vsub.s32 %v295, %v297
        %v299 = vrot.slane %v285, %v298
        %v300 = vcombine.high %v292, %v292
        %v301 = vcombine.high %v299, %v299
        %v303 = vunpack.c.l.s4 1966171168
        %v304 = vunpack.c.0.s8 %v303
        %v305 = vlaneseq
        %v306 = vshrl.u32 %v305, 7
        %v307 = vsub.s32 %v304, %v306
        %v308 = vrot.slane %v292, %v307
        %v310 = vunpack.c.l.s4 1966171168
        %v311 = vunpack.c.0.s8 %v310
        %v312 = vlaneseq
        %v313 = vshrl.u32 %v312, 7
        %v314 = vsub.s32 %v311, %v313
        %v315 = vrot.slane %v299, %v314
        %v317 = vunpack.c.l.s4 1966171168
        %v318 = vunpack.c.0.s8 %v317
        %v319 = vlaneseq
        %v320 = vshrl.u32 %v319, 7
        %v321 = vsub.s32 %v318, %v320
        %v322 = vrot.slane %v300, %v321
        %v324 = vunpack.c.l.s4 1966171168
        %v325 = vunpack.c.0.s8 %v324
        %v326 = vlaneseq
        %v327 = vshrl.u32 %v326, 7
        %v328 = vsub.s32 %v325, %v327
        %v329 = vrot.slane %v301, %v328
        %v330 = vcombine.high %v308, %v308
        %v331 = vcombine.high %v315, %v315
        %v332 = vcombine.high %v322, %v322
        %v333 = vcombine.high %v329, %v329
        %342 = vst.msk [vmem:[%s136 + $0x1] sm:$0x1] %vm240, %v308
        %343 = vst.msk [vmem:[%s136 + $0x9] sm:$0x1] %vm240, %v322
        %344 = vst.msk [vmem:[%s136 + $0x11] sm:$0x1] %vm240, %v330
        %345 = vst.msk [vmem:[%s136 + $0x19] sm:$0x1] %vm240, %v332
        %346 = vst.msk [vmem:[%s136 + $0x21] sm:$0x1] %vm240, %v315
        %347 = vst.msk [vmem:[%s136 + $0x29] sm:$0x1] %vm240, %v329
        %348 = vst.msk [vmem:[%s136 + $0x31] sm:$0x1] %vm240, %v331
        %349 = vst.msk [vmem:[%s136 + $0x39] sm:$0x1] %vm240, %v333
        %s350 = scalar_lea.vmem %s146, 32
        %v351 = vld [vmem:[%s350] sm:$0xff]
        %v352 = vld [vmem:[%s350 + $0x8] sm:$0xff]
        %353 = vxpose.xlu0.b32.start [1/16] %v351, 128
        %354 = vxpose.xlu0.b32.cont [2/16] %v352, 128
        %355 = vxpose.xlu0.b32.cont [3/16] 0.0, 128
        %356 = vxpose.xlu0.b32.cont [4/16] 0.0, 128
        %357 = vxpose.xlu0.b32.cont [5/16] 0.0, 128
        %358 = vxpose.xlu0.b32.cont [6/16] 0.0, 128
        %359 = vxpose.xlu0.b32.cont [7/16] 0.0, 128
        %360 = vxpose.xlu0.b32.cont [8/16] 0.0, 128
        %361 = vxpose.xlu0.b32.cont [9/16] 0.0, 128
        %362 = vxpose.xlu0.b32.cont [10/16] 0.0, 128
        %363 = vxpose.xlu0.b32.cont [11/16] 0.0, 128
        %364 = vxpose.xlu0.b32.cont [12/16] 0.0, 128
        %365 = vxpose.xlu0.b32.cont [13/16] 0.0, 128
        %366 = vxpose.xlu0.b32.cont [14/16] 0.0, 128
        %367 = vxpose.xlu0.b32.cont [15/16] 0.0, 128
        %368 = vxpose.xlu0.b32.end [16/16] 0.0, 128
        %v369 = vpop.trf.xlu0
        %v370 = vpop.trf.xlu0
        %v371 = vpop.trf.xlu0
        %v372 = vpop.trf.xlu0
        %v373 = vpop.trf.xlu0
        %v374 = vpop.trf.xlu0
        %v375 = vpop.trf.xlu0
        %v376 = vpop.trf.xlu0
        %v377 = vpop.trf.xlu0
        %v378 = vpop.trf.xlu0
        %v379 = vpop.trf.xlu0
        %v380 = vpop.trf.xlu0
        %v381 = vpop.trf.xlu0
        %v382 = vpop.trf.xlu0
        %v383 = vpop.trf.xlu0
        %v384 = vpop.trf.xlu0
        %v386 = vcombine.high %v369, %v369
        %v388 = vunpack.c.l.s4 1966171168
        %v389 = vunpack.c.0.s8 %v388
        %v390 = vlaneseq
        %v391 = vshrl.u32 %v390, 7
        %v392 = vsub.s32 %v389, %v391
        %v393 = vrot.slane %v369, %v392
        %v395 = vunpack.c.l.s4 1966171168
        %v396 = vunpack.c.0.s8 %v395
        %v397 = vlaneseq
        %v398 = vshrl.u32 %v397, 7
        %v399 = vsub.s32 %v396, %v398
        %v400 = vrot.slane %v386, %v399
        %v401 = vcombine.high %v393, %v393
        %v402 = vcombine.high %v400, %v400
        %v404 = vunpack.c.l.s4 1966171168
        %v405 = vunpack.c.0.s8 %v404
        %v406 = vlaneseq
        %v407 = vshrl.u32 %v406, 7
        %v408 = vsub.s32 %v405, %v407
        %v409 = vrot.slane %v393, %v408
        %v411 = vunpack.c.l.s4 1966171168
        %v412 = vunpack.c.0.s8 %v411
        %v413 = vlaneseq
        %v414 = vshrl.u32 %v413, 7
        %v415 = vsub.s32 %v412, %v414
        %v416 = vrot.slane %v400, %v415
        %v418 = vunpack.c.l.s4 1966171168
        %v419 = vunpack.c.0.s8 %v418
        %v420 = vlaneseq
        %v421 = vshrl.u32 %v420, 7
        %v422 = vsub.s32 %v419, %v421
        %v423 = vrot.slane %v401, %v422
        %v425 = vunpack.c.l.s4 1966171168
        %v426 = vunpack.c.0.s8 %v425
        %v427 = vlaneseq
        %v428 = vshrl.u32 %v427, 7
        %v429 = vsub.s32 %v426, %v428
        %v430 = vrot.slane %v402, %v429
        %v431 = vcombine.high %v409, %v409
        %v432 = vcombine.high %v416, %v416
        %v433 = vcombine.high %v423, %v423
        %v434 = vcombine.high %v430, %v430
        %443 = vst.msk [vmem:[%s136 + $0x2] sm:$0x1] %vm240, %v409
        %444 = vst.msk [vmem:[%s136 + $0xa] sm:$0x1] %vm240, %v423
        %445 = vst.msk [vmem:[%s136 + $0x12] sm:$0x1] %vm240, %v431
        %446 = vst.msk [vmem:[%s136 + $0x1a] sm:$0x1] %vm240, %v433
        %447 = vst.msk [vmem:[%s136 + $0x22] sm:$0x1] %vm240, %v416
        %448 = vst.msk [vmem:[%s136 + $0x2a] sm:$0x1] %vm240, %v430
        %449 = vst.msk [vmem:[%s136 + $0x32] sm:$0x1] %vm240, %v432
        %450 = vst.msk [vmem:[%s136 + $0x3a] sm:$0x1] %vm240, %v434
        %s451 = scalar_lea.vmem %s146, 48
        %v452 = vld [vmem:[%s451] sm:$0xff]
        %v453 = vld [vmem:[%s451 + $0x8] sm:$0xff]
        %454 = vxpose.xlu0.b32.start [1/16] %v452, 128
        %455 = vxpose.xlu0.b32.cont [2/16] %v453, 128
        %456 = vxpose.xlu0.b32.cont [3/16] 0.0, 128
        %457 = vxpose.xlu0.b32.cont [4/16] 0.0, 128
        %458 = vxpose.xlu0.b32.cont [5/16] 0.0, 128
        %459 = vxpose.xlu0.b32.cont [6/16] 0.0, 128
        %460 = vxpose.xlu0.b32.cont [7/16] 0.0, 128
        %461 = vxpose.xlu0.b32.cont [8/16] 0.0, 128
        %462 = vxpose.xlu0.b32.cont [9/16] 0.0, 128
        %463 = vxpose.xlu0.b32.cont [10/16] 0.0, 128
        %464 = vxpose.xlu0.b32.cont [11/16] 0.0, 128
        %465 = vxpose.xlu0.b32.cont [12/16] 0.0, 128
        %466 = vxpose.xlu0.b32.cont [13/16] 0.0, 128
        %467 = vxpose.xlu0.b32.cont [14/16] 0.0, 128
        %468 = vxpose.xlu0.b32.cont [15/16] 0.0, 128
        %469 = vxpose.xlu0.b32.end [16/16] 0.0, 128
        %v470 = vpop.trf.xlu0
        %v471 = vpop.trf.xlu0
        %v472 = vpop.trf.xlu0
        %v473 = vpop.trf.xlu0
        %v474 = vpop.trf.xlu0
        %v475 = vpop.trf.xlu0
        %v476 = vpop.trf.xlu0
        %v477 = vpop.trf.xlu0
        %v478 = vpop.trf.xlu0
        %v479 = vpop.trf.xlu0
        %v480 = vpop.trf.xlu0
        %v481 = vpop.trf.xlu0
        %v482 = vpop.trf.xlu0
        %v483 = vpop.trf.xlu0
        %v484 = vpop.trf.xlu0
        %v485 = vpop.trf.xlu0
        %v487 = vcombine.high %v470, %v470
        %v489 = vunpack.c.l.s4 1966171168
        %v490 = vunpack.c.0.s8 %v489
        %v491 = vlaneseq
        %v492 = vshrl.u32 %v491, 7
        %v493 = vsub.s32 %v490, %v492
        %v494 = vrot.slane %v470, %v493
        %v496 = vunpack.c.l.s4 1966171168
        %v497 = vunpack.c.0.s8 %v496
        %v498 = vlaneseq
        %v499 = vshrl.u32 %v498, 7
        %v500 = vsub.s32 %v497, %v499
        %v501 = vrot.slane %v487, %v500
        %v502 = vcombine.high %v494, %v494
        %v503 = vcombine.high %v501, %v501
        %v505 = vunpack.c.l.s4 1966171168
        %v506 = vunpack.c.0.s8 %v505
        %v507 = vlaneseq
        %v508 = vshrl.u32 %v507, 7
        %v509 = vsub.s32 %v506, %v508
        %v510 = vrot.slane %v494, %v509
        %v512 = vunpack.c.l.s4 1966171168
        %v513 = vunpack.c.0.s8 %v512
        %v514 = vlaneseq
        %v515 = vshrl.u32 %v514, 7
        %v516 = vsub.s32 %v513, %v515
        %v517 = vrot.slane %v501, %v516
        %v519 = vunpack.c.l.s4 1966171168
        %v520 = vunpack.c.0.s8 %v519
        %v521 = vlaneseq
        %v522 = vshrl.u32 %v521, 7
        %v523 = vsub.s32 %v520, %v522
        %v524 = vrot.slane %v502, %v523
        %v526 = vunpack.c.l.s4 1966171168
        %v527 = vunpack.c.0.s8 %v526
        %v528 = vlaneseq
        %v529 = vshrl.u32 %v528, 7
        %v530 = vsub.s32 %v527, %v529
        %v531 = vrot.slane %v503, %v530
        %v532 = vcombine.high %v510, %v510
        %v533 = vcombine.high %v517, %v517
        %v534 = vcombine.high %v524, %v524
        %v535 = vcombine.high %v531, %v531
        %544 = vst.msk [vmem:[%s136 + $0x3] sm:$0x1] %vm240, %v510
        %545 = vst.msk [vmem:[%s136 + $0xb] sm:$0x1] %vm240, %v524
        %546 = vst.msk [vmem:[%s136 + $0x13] sm:$0x1] %vm240, %v532
        %547 = vst.msk [vmem:[%s136 + $0x1b] sm:$0x1] %vm240, %v534
        %548 = vst.msk [vmem:[%s136 + $0x23] sm:$0x1] %vm240, %v517
        %549 = vst.msk [vmem:[%s136 + $0x2b] sm:$0x1] %vm240, %v531
        %550 = vst.msk [vmem:[%s136 + $0x33] sm:$0x1] %vm240, %v533
        %551 = vst.msk [vmem:[%s136 + $0x3b] sm:$0x1] %vm240, %v535
        %s552 = scalar_lea.vmem %s146, 64
        %v553 = vld [vmem:[%s552] sm:$0xff]
        %v554 = vld [vmem:[%s552 + $0x8] sm:$0xff]
        %555 = vxpose.xlu0.b32.start [1/16] %v553, 128
        %556 = vxpose.xlu0.b32.cont [2/16] %v554, 128
        %557 = vxpose.xlu0.b32.cont [3/16] 0.0, 128
        %558 = vxpose.xlu0.b32.cont [4/16] 0.0, 128
        %559 = vxpose.xlu0.b32.cont [5/16] 0.0, 128
        %560 = vxpose.xlu0.b32.cont [6/16] 0.0, 128
        %561 = vxpose.xlu0.b32.cont [7/16] 0.0, 128
        %562 = vxpose.xlu0.b32.cont [8/16] 0.0, 128
        %563 = vxpose.xlu0.b32.cont [9/16] 0.0, 128
        %564 = vxpose.xlu0.b32.cont [10/16] 0.0, 128
        %565 = vxpose.xlu0.b32.cont [11/16] 0.0, 128
        %566 = vxpose.xlu0.b32.cont [12/16] 0.0, 128
        %567 = vxpose.xlu0.b32.cont [13/16] 0.0, 128
        %568 = vxpose.xlu0.b32.cont [14/16] 0.0, 128
        %569 = vxpose.xlu0.b32.cont [15/16] 0.0, 128
        %570 = vxpose.xlu0.b32.end [16/16] 0.0, 128
        %v571 = vpop.trf.xlu0
        %v572 = vpop.trf.xlu0
        %v573 = vpop.trf.xlu0
        %v574 = vpop.trf.xlu0
        %v575 = vpop.trf.xlu0
        %v576 = vpop.trf.xlu0
        %v577 = vpop.trf.xlu0
        %v578 = vpop.trf.xlu0
        %v579 = vpop.trf.xlu0
        %v580 = vpop.trf.xlu0
        %v581 = vpop.trf.xlu0
        %v582 = vpop.trf.xlu0
        %v583 = vpop.trf.xlu0
        %v584 = vpop.trf.xlu0
        %v585 = vpop.trf.xlu0
        %v586 = vpop.trf.xlu0
        %v588 = vcombine.high %v571, %v571
        %v590 = vunpack.c.l.s4 1966171168
        %v591 = vunpack.c.0.s8 %v590
        %v592 = vlaneseq
        %v593 = vshrl.u32 %v592, 7
        %v594 = vsub.s32 %v591, %v593
        %v595 = vrot.slane %v571, %v594
        %v597 = vunpack.c.l.s4 1966171168
        %v598 = vunpack.c.0.s8 %v597
        %v599 = vlaneseq
        %v600 = vshrl.u32 %v599, 7
        %v601 = vsub.s32 %v598, %v600
        %v602 = vrot.slane %v588, %v601
        %v603 = vcombine.high %v595, %v595
        %v604 = vcombine.high %v602, %v602
        %v606 = vunpack.c.l.s4 1966171168
        %v607 = vunpack.c.0.s8 %v606
        %v608 = vlaneseq
        %v609 = vshrl.u32 %v608, 7
        %v610 = vsub.s32 %v607, %v609
        %v611 = vrot.slane %v595, %v610
        %v613 = vunpack.c.l.s4 1966171168
        %v614 = vunpack.c.0.s8 %v613
        %v615 = vlaneseq
        %v616 = vshrl.u32 %v615, 7
        %v617 = vsub.s32 %v614, %v616
        %v618 = vrot.slane %v602, %v617
        %v620 = vunpack.c.l.s4 1966171168
        %v621 = vunpack.c.0.s8 %v620
        %v622 = vlaneseq
        %v623 = vshrl.u32 %v622, 7
        %v624 = vsub.s32 %v621, %v623
        %v625 = vrot.slane %v603, %v624
        %v627 = vunpack.c.l.s4 1966171168
        %v628 = vunpack.c.0.s8 %v627
        %v629 = vlaneseq
        %v630 = vshrl.u32 %v629, 7
        %v631 = vsub.s32 %v628, %v630
        %v632 = vrot.slane %v604, %v631
        %v633 = vcombine.high %v611, %v611
        %v634 = vcombine.high %v618, %v618
        %v635 = vcombine.high %v625, %v625
        %v636 = vcombine.high %v632, %v632
        %645 = vst.msk [vmem:[%s136 + $0x4] sm:$0x1] %vm240, %v611
        %646 = vst.msk [vmem:[%s136 + $0xc] sm:$0x1] %vm240, %v625
        %647 = vst.msk [vmem:[%s136 + $0x14] sm:$0x1] %vm240, %v633
        %648 = vst.msk [vmem:[%s136 + $0x1c] sm:$0x1] %vm240, %v635
        %649 = vst.msk [vmem:[%s136 + $0x24] sm:$0x1] %vm240, %v618
        %650 = vst.msk [vmem:[%s136 + $0x2c] sm:$0x1] %vm240, %v632
        %651 = vst.msk [vmem:[%s136 + $0x34] sm:$0x1] %vm240, %v634
        %652 = vst.msk [vmem:[%s136 + $0x3c] sm:$0x1] %vm240, %v636
        %s653 = scalar_lea.vmem %s146, 80
        %v654 = vld [vmem:[%s653] sm:$0xff]
        %v655 = vld [vmem:[%s653 + $0x8] sm:$0xff]
        %656 = vxpose.xlu0.b32.start [1/16] %v654, 128
        %657 = vxpose.xlu0.b32.cont [2/16] %v655, 128
        %658 = vxpose.xlu0.b32.cont [3/16] 0.0, 128
        %659 = vxpose.xlu0.b32.cont [4/16] 0.0, 128
        %660 = vxpose.xlu0.b32.cont [5/16] 0.0, 128
        %661 = vxpose.xlu0.b32.cont [6/16] 0.0, 128
        %662 = vxpose.xlu0.b32.cont [7/16] 0.0, 128
        %663 = vxpose.xlu0.b32.cont [8/16] 0.0, 128
        %664 = vxpose.xlu0.b32.cont [9/16] 0.0, 128
        %665 = vxpose.xlu0.b32.cont [10/16] 0.0, 128
        %666 = vxpose.xlu0.b32.cont [11/16] 0.0, 128
        %667 = vxpose.xlu0.b32.cont [12/16] 0.0, 128
        %668 = vxpose.xlu0.b32.cont [13/16] 0.0, 128
        %669 = vxpose.xlu0.b32.cont [14/16] 0.0, 128
        %670 = vxpose.xlu0.b32.cont [15/16] 0.0, 128
        %671 = vxpose.xlu0.b32.end [16/16] 0.0, 128
        %v672 = vpop.trf.xlu0
        %v673 = vpop.trf.xlu0
        %v674 = vpop.trf.xlu0
        %v675 = vpop.trf.xlu0
        %v676 = vpop.trf.xlu0
        %v677 = vpop.trf.xlu0
        %v678 = vpop.trf.xlu0
        %v679 = vpop.trf.xlu0
        %v680 = vpop.trf.xlu0
        %v681 = vpop.trf.xlu0
        %v682 = vpop.trf.xlu0
        %v683 = vpop.trf.xlu0
        %v684 = vpop.trf.xlu0
        %v685 = vpop.trf.xlu0
        %v686 = vpop.trf.xlu0
        %v687 = vpop.trf.xlu0
        %v689 = vcombine.high %v672, %v672
        %v691 = vunpack.c.l.s4 1966171168
        %v692 = vunpack.c.0.s8 %v691
        %v693 = vlaneseq
        %v694 = vshrl.u32 %v693, 7
        %v695 = vsub.s32 %v692, %v694
        %v696 = vrot.slane %v672, %v695
        %v698 = vunpack.c.l.s4 1966171168
        %v699 = vunpack.c.0.s8 %v698
        %v700 = vlaneseq
        %v701 = vshrl.u32 %v700, 7
        %v702 = vsub.s32 %v699, %v701
        %v703 = vrot.slane %v689, %v702
        %v704 = vcombine.high %v696, %v696
        %v705 = vcombine.high %v703, %v703
        %v707 = vunpack.c.l.s4 1966171168
        %v708 = vunpack.c.0.s8 %v707
        %v709 = vlaneseq
        %v710 = vshrl.u32 %v709, 7
        %v711 = vsub.s32 %v708, %v710
        %v712 = vrot.slane %v696, %v711
        %v714 = vunpack.c.l.s4 1966171168
        %v715 = vunpack.c.0.s8 %v714
        %v716 = vlaneseq
        %v717 = vshrl.u32 %v716, 7
        %v718 = vsub.s32 %v715, %v717
        %v719 = vrot.slane %v703, %v718
        %v721 = vunpack.c.l.s4 1966171168
        %v722 = vunpack.c.0.s8 %v721
        %v723 = vlaneseq
        %v724 = vshrl.u32 %v723, 7
        %v725 = vsub.s32 %v722, %v724
        %v726 = vrot.slane %v704, %v725
        %v728 = vunpack.c.l.s4 1966171168
        %v729 = vunpack.c.0.s8 %v728
        %v730 = vlaneseq
        %v731 = vshrl.u32 %v730, 7
        %v732 = vsub.s32 %v729, %v731
        %v733 = vrot.slane %v705, %v732
        %v734 = vcombine.high %v712, %v712
        %v735 = vcombine.high %v719, %v719
        %v736 = vcombine.high %v726, %v726
        %v737 = vcombine.high %v733, %v733
        %746 = vst.msk [vmem:[%s136 + $0x5] sm:$0x1] %vm240, %v712
        %747 = vst.msk [vmem:[%s136 + $0xd] sm:$0x1] %vm240, %v726
        %748 = vst.msk [vmem:[%s136 + $0x15] sm:$0x1] %vm240, %v734
        %749 = vst.msk [vmem:[%s136 + $0x1d] sm:$0x1] %vm240, %v736
        %750 = vst.msk [vmem:[%s136 + $0x25] sm:$0x1] %vm240, %v719
        %751 = vst.msk [vmem:[%s136 + $0x2d] sm:$0x1] %vm240, %v733
        %752 = vst.msk [vmem:[%s136 + $0x35] sm:$0x1] %vm240, %v735
        %753 = vst.msk [vmem:[%s136 + $0x3d] sm:$0x1] %vm240, %v737
        %s754 = scalar_lea.vmem %s146, 96
        %v755 = vld [vmem:[%s754] sm:$0xff]
        %v756 = vld [vmem:[%s754 + $0x8] sm:$0xff]
        %757 = vxpose.xlu0.b32.start [1/16] %v755, 128
        %758 = vxpose.xlu0.b32.cont [2/16] %v756, 128
        %759 = vxpose.xlu0.b32.cont [3/16] 0.0, 128
        %760 = vxpose.xlu0.b32.cont [4/16] 0.0, 128
        %761 = vxpose.xlu0.b32.cont [5/16] 0.0, 128
        %762 = vxpose.xlu0.b32.cont [6/16] 0.0, 128
        %763 = vxpose.xlu0.b32.cont [7/16] 0.0, 128
        %764 = vxpose.xlu0.b32.cont [8/16] 0.0, 128
        %765 = vxpose.xlu0.b32.cont [9/16] 0.0, 128
        %766 = vxpose.xlu0.b32.cont [10/16] 0.0, 128
        %767 = vxpose.xlu0.b32.cont [11/16] 0.0, 128
        %768 = vxpose.xlu0.b32.cont [12/16] 0.0, 128
        %769 = vxpose.xlu0.b32.cont [13/16] 0.0, 128
        %770 = vxpose.xlu0.b32.cont [14/16] 0.0, 128
        %771 = vxpose.xlu0.b32.cont [15/16] 0.0, 128
        %772 = vxpose.xlu0.b32.end [16/16] 0.0, 128
        %v773 = vpop.trf.xlu0
        %v774 = vpop.trf.xlu0
        %v775 = vpop.trf.xlu0
        %v776 = vpop.trf.xlu0
        %v777 = vpop.trf.xlu0
        %v778 = vpop.trf.xlu0
        %v779 = vpop.trf.xlu0
        %v780 = vpop.trf.xlu0
        %v781 = vpop.trf.xlu0
        %v782 = vpop.trf.xlu0
        %v783 = vpop.trf.xlu0
        %v784 = vpop.trf.xlu0
        %v785 = vpop.trf.xlu0
        %v786 = vpop.trf.xlu0
        %v787 = vpop.trf.xlu0
        %v788 = vpop.trf.xlu0
        %v790 = vcombine.high %v773, %v773
        %v792 = vunpack.c.l.s4 1966171168
        %v793 = vunpack.c.0.s8 %v792
        %v794 = vlaneseq
        %v795 = vshrl.u32 %v794, 7
        %v796 = vsub.s32 %v793, %v795
        %v797 = vrot.slane %v773, %v796
        %v799 = vunpack.c.l.s4 1966171168
        %v800 = vunpack.c.0.s8 %v799
        %v801 = vlaneseq
        %v802 = vshrl.u32 %v801, 7
        %v803 = vsub.s32 %v800, %v802
        %v804 = vrot.slane %v790, %v803
        %v805 = vcombine.high %v797, %v797
        %v806 = vcombine.high %v804, %v804
        %v808 = vunpack.c.l.s4 1966171168
        %v809 = vunpack.c.0.s8 %v808
        %v810 = vlaneseq
        %v811 = vshrl.u32 %v810, 7
        %v812 = vsub.s32 %v809, %v811
        %v813 = vrot.slane %v797, %v812
        %v815 = vunpack.c.l.s4 1966171168
        %v816 = vunpack.c.0.s8 %v815
        %v817 = vlaneseq
        %v818 = vshrl.u32 %v817, 7
        %v819 = vsub.s32 %v816, %v818
        %v820 = vrot.slane %v804, %v819
        %v822 = vunpack.c.l.s4 1966171168
        %v823 = vunpack.c.0.s8 %v822
        %v824 = vlaneseq
        %v825 = vshrl.u32 %v824, 7
        %v826 = vsub.s32 %v823, %v825
        %v827 = vrot.slane %v805, %v826
        %v829 = vunpack.c.l.s4 1966171168
        %v830 = vunpack.c.0.s8 %v829
        %v831 = vlaneseq
        %v832 = vshrl.u32 %v831, 7
        %v833 = vsub.s32 %v830, %v832
        %v834 = vrot.slane %v806, %v833
        %v835 = vcombine.high %v813, %v813
        %v836 = vcombine.high %v820, %v820
        %v837 = vcombine.high %v827, %v827
        %v838 = vcombine.high %v834, %v834
        %847 = vst.msk [vmem:[%s136 + $0x6] sm:$0x1] %vm240, %v813
        %848 = vst.msk [vmem:[%s136 + $0xe] sm:$0x1] %vm240, %v827
        %849 = vst.msk [vmem:[%s136 + $0x16] sm:$0x1] %vm240, %v835
        %850 = vst.msk [vmem:[%s136 + $0x1e] sm:$0x1] %vm240, %v837
        %851 = vst.msk [vmem:[%s136 + $0x26] sm:$0x1] %vm240, %v820
        %852 = vst.msk [vmem:[%s136 + $0x2e] sm:$0x1] %vm240, %v834
        %853 = vst.msk [vmem:[%s136 + $0x36] sm:$0x1] %vm240, %v836
        %854 = vst.msk [vmem:[%s136 + $0x3e] sm:$0x1] %vm240, %v838
        %s855 = scalar_lea.vmem %s146, 112
        %v856 = vld [vmem:[%s855] sm:$0xff]
        %v857 = vld [vmem:[%s855 + $0x8] sm:$0xff]
        %858 = vxpose.xlu0.b32.start [1/16] %v856, 128
        %859 = vxpose.xlu0.b32.cont [2/16] %v857, 128
        %860 = vxpose.xlu0.b32.cont [3/16] 0.0, 128
        %861 = vxpose.xlu0.b32.cont [4/16] 0.0, 128
        %862 = vxpose.xlu0.b32.cont [5/16] 0.0, 128
        %863 = vxpose.xlu0.b32.cont [6/16] 0.0, 128
        %864 = vxpose.xlu0.b32.cont [7/16] 0.0, 128
        %865 = vxpose.xlu0.b32.cont [8/16] 0.0, 128
        %866 = vxpose.xlu0.b32.cont [9/16] 0.0, 128
        %867 = vxpose.xlu0.b32.cont [10/16] 0.0, 128
        %868 = vxpose.xlu0.b32.cont [11/16] 0.0, 128
        %869 = vxpose.xlu0.b32.cont [12/16] 0.0, 128
        %870 = vxpose.xlu0.b32.cont [13/16] 0.0, 128
        %871 = vxpose.xlu0.b32.cont [14/16] 0.0, 128
        %872 = vxpose.xlu0.b32.cont [15/16] 0.0, 128
        %873 = vxpose.xlu0.b32.end [16/16] 0.0, 128
        %v874 = vpop.trf.xlu0
        %v875 = vpop.trf.xlu0
        %v876 = vpop.trf.xlu0
        %v877 = vpop.trf.xlu0
        %v878 = vpop.trf.xlu0
        %v879 = vpop.trf.xlu0
        %v880 = vpop.trf.xlu0
        %v881 = vpop.trf.xlu0
        %v882 = vpop.trf.xlu0
        %v883 = vpop.trf.xlu0
        %v884 = vpop.trf.xlu0
        %v885 = vpop.trf.xlu0
        %v886 = vpop.trf.xlu0
        %v887 = vpop.trf.xlu0
        %v888 = vpop.trf.xlu0
        %v889 = vpop.trf.xlu0
        %v891 = vcombine.high %v874, %v874
        %v893 = vunpack.c.l.s4 1966171168
        %v894 = vunpack.c.0.s8 %v893
        %v895 = vlaneseq
        %v896 = vshrl.u32 %v895, 7
        %v897 = vsub.s32 %v894, %v896
        %v898 = vrot.slane %v874, %v897
        %v900 = vunpack.c.l.s4 1966171168
        %v901 = vunpack.c.0.s8 %v900
        %v902 = vlaneseq
        %v903 = vshrl.u32 %v902, 7
        %v904 = vsub.s32 %v901, %v903
        %v905 = vrot.slane %v891, %v904
        %v906 = vcombine.high %v898, %v898
        %v907 = vcombine.high %v905, %v905
        %v909 = vunpack.c.l.s4 1966171168
        %v910 = vunpack.c.0.s8 %v909
        %v911 = vlaneseq
        %v912 = vshrl.u32 %v911, 7
        %v913 = vsub.s32 %v910, %v912
        %v914 = vrot.slane %v898, %v913
        %v916 = vunpack.c.l.s4 1966171168
        %v917 = vunpack.c.0.s8 %v916
        %v918 = vlaneseq
        %v919 = vshrl.u32 %v918, 7
        %v920 = vsub.s32 %v917, %v919
        %v921 = vrot.slane %v905, %v920
        %v923 = vunpack.c.l.s4 1966171168
        %v924 = vunpack.c.0.s8 %v923
        %v925 = vlaneseq
        %v926 = vshrl.u32 %v925, 7
        %v927 = vsub.s32 %v924, %v926
        %v928 = vrot.slane %v906, %v927
        %v930 = vunpack.c.l.s4 1966171168
        %v931 = vunpack.c.0.s8 %v930
        %v932 = vlaneseq
        %v933 = vshrl.u32 %v932, 7
        %v934 = vsub.s32 %v931, %v933
        %v935 = vrot.slane %v907, %v934
        %v936 = vcombine.high %v914, %v914
        %v937 = vcombine.high %v921, %v921
        %v938 = vcombine.high %v928, %v928
        %v939 = vcombine.high %v935, %v935
        %948 = vst.msk [vmem:[%s136 + $0x7] sm:$0x1] %vm240, %v914
        %949 = vst.msk [vmem:[%s136 + $0xf] sm:$0x1] %vm240, %v928
        %950 = vst.msk [vmem:[%s136 + $0x17] sm:$0x1] %vm240, %v936
        %951 = vst.msk [vmem:[%s136 + $0x1f] sm:$0x1] %vm240, %v938
        %952 = vst.msk [vmem:[%s136 + $0x27] sm:$0x1] %vm240, %v921
        %953 = vst.msk [vmem:[%s136 + $0x2f] sm:$0x1] %vm240, %v935
        %954 = vst.msk [vmem:[%s136 + $0x37] sm:$0x1] %vm240, %v937
        %955 = vst.msk [vmem:[%s136 + $0x3f] sm:$0x1] %vm240, %v939
        %s956 = sand.u32 %s65, 1
        %s957 = scalar_lea.sflag [#allocation3], %s956
        %s958 = sand.u32 %s65, 1
        %s959 = smul.addr %s958, 64
        %s960 = scalar_lea.vmem [#allocation2], %s959
        // Predicated region
        $region25: #{tpu_custom_call.1} parent=23 // pred_check
          %p961 = pneg %p75
        $region26: #{tpu_custom_call.1} parent=23 // pred_check_branch
          %963 = sbr.rel (%p961) target = $region28
        $region27: #{tpu_custom_call.1} parent=23 // pred_region
          %s965 = ssub.s32 1024, 1024
          %966 = vsyncadd %s957, %s965
          %s967 = smul.addr %s19, 16
          %s968 = sadd.s32 %s20, %s967
          %s969 = smul.addr %s968, 128
          %s970 = scalar_lea.hbm %s1, %s969
          %s971 = sshll.u32 %s960, 4
          %s972 = int_to_ptr.vmem [resolvable:$true] %s971
          %977 = dma.vmem_to_hbm [thread:$0]  %s972, 1024, %s970, %s957, 128, 256, 8
        $region28: #{tpu_custom_call.1} parent=23 // pred_fallthru
          _
      $region24: #{tpu_custom_call.1} parent=5 // pred_fallthru
        _
      %p978 = scmp.le.s32.totalorder 2, %s10
      // Predicated region
      $region29: #{tpu_custom_call.1} parent=5 // pred_check
        %p979 = pneg %p978
      $region30: #{tpu_custom_call.1} parent=5 // pred_check_branch
        %981 = sbr.rel (%p979) target = $region32
      $region31: #{tpu_custom_call.1} parent=5 // pred_region
        %s982 = ssub.s32 %s10, 2
        // Predicated region
        $region33: #{tpu_custom_call.1} parent=31 // pred_check
          %p983 = pneg %p81
        $region34: #{tpu_custom_call.1} parent=31 // pred_check_branch
          %985 = sbr.rel (%p983) target = $region36
        $region35: #{tpu_custom_call.1} parent=31 // pred_region
          %s986 = sand.u32 %s66, 1
          %s987 = scalar_lea.sflag [#allocation3], %s986
          %s988 = sand.u32 %s66, 1
          %s989 = smul.addr %s988, 64
          %s990 = scalar_lea.vmem [#allocation2], %s989
          %991 = dma.done %s987, 1024
        $region36: #{tpu_custom_call.1} parent=31 // pred_fallthru
          _
      $region32: #{tpu_custom_call.1} parent=5 // pred_fallthru
        _
    $region6: #{tpu_custom_call.1} parent=1 // loop_footer
      %s14 = sadd.s32 1, %s10
    $region7: #{tpu_custom_call.1} parent=1 // loop_footer_branch
      %9 = sbr.rel target = $region3
    $region8: #{tpu_custom_call.1} parent=1 // loop_exit
      _
    %992 = vsyncpa [#allocation3], 1
    %s993 = scalar_lea.sflag [#allocation3], 1
    %994 = vsyncpa %s993, 1

</llo_original>
